<compile_context>
chip_gen: v7x
topology: tpu7x:2x2x1
jax: 0.10.0
libtpu: 0.0.40
codegen_flags: <defaults>
</compile_context>

<pallas_src>
import functools

import jax
import jax.numpy as jnp
from jax import lax
from jax.experimental import pallas as pl
from jax.experimental.pallas import tpu as pltpu


_MAX_TILE_D = 2048        # lane-dim cap per block (multiple of 128)
_BLOCK_BYTES = 8 << 20    # per-input DMA block budget (in input-dtype bytes)
_CHUNK_BYTES = 1 << 20    # per-chunk f32 compute-temporary budget in the kernel


def _tensorcores_per_chip():
    """Best-effort count of TensorCores addressable by one Pallas kernel."""
    try:
        kind = jax.devices()[0].device_kind.lower()
    except Exception:
        return 1
    # Megacore (v4/v5p) and dual-TC (v7x) chips benefit from a leading
    # "parallel" axis; single-TC chips (v5e/v6e) get P = 1 so the axis does
    # not degenerate into a useless serial loop.
    for tag in ("v7", "v4", "v5p"):
        if tag in kind:
            return 2
    return 1


def _make_sse_kernel(*, B, D, tile_b, tile_d, chunk_rows, t_bp, group8,
                     need_row_mask, need_col_mask):
    n_chunks = tile_b // chunk_rows

    def kernel(y_ref, yp_ref, acc_ref):
        p = pl.program_id(0)   # TensorCore slice
        j = pl.program_id(1)   # feature (lane) block
        i = pl.program_id(2)   # batch (row) block -- reduction axis

        @pl.when(i == 0)
        def _init():
            acc_ref[...] = jnp.zeros_like(acc_ref)

        # Logical (unclamped) element offsets of this block.
        row_off = (p * t_bp + i) * tile_b
        col_off = j * tile_d

        def accum_chunk(yv, ypv, chunk_row_off, masked):
            d = yv.astype(jnp.float32) - ypv.astype(jnp.float32)
            d2 = d * d
            if masked:
                # Zero the *squared* difference for out-of-range positions so
                # padded / garbage data contributes exactly 0 to the sum.
                if need_row_mask:
                    rid = (row_off + chunk_row_off
                           + lax.broadcasted_iota(jnp.int32, d2.shape, 0))
                    d2 = jnp.where(rid < B, d2, 0.0)
                if need_col_mask:
                    cid = col_off + lax.broadcasted_iota(jnp.int32, d2.shape, 1)
                    d2 = jnp.where(cid < D, d2, 0.0)
            if group8:
                # (rows, tile_d) -> (rows//8, 8, tile_d): pure VPU adds into
                # the vreg-shaped accumulator, no cross-lane XLU work.
                acc_ref[...] += d2.reshape(-1, 8, tile_d).sum(axis=0)
            else:
                acc_ref[...] += d2.sum(axis=0, keepdims=True)

        def accumulate(masked):
            if n_chunks == 1:
                accum_chunk(y_ref[...], yp_ref[...], 0, masked)
            else:
                @pl.loop(0, n_chunks)
                def _chunks(c):
                    off = pl.multiple_of(c * chunk_rows, chunk_rows)
                    accum_chunk(y_ref[pl.ds(off, chunk_rows), :],
                                yp_ref[pl.ds(off, chunk_rows), :], off, masked)

        if not (need_row_mask or need_col_mask):
            accumulate(masked=False)                 # fully aligned: no masks at all
        else:
            conds = []
            if need_row_mask:
                conds.append(row_off + tile_b <= B)
            if need_col_mask:
                conds.append(col_off + tile_d <= D)
            block_full = functools.reduce(jnp.logical_and, conds)

            @pl.when(block_full)
            def _fast():
                accumulate(masked=False)

            @pl.when(jnp.logical_not(block_full))
            def _masked():
                accumulate(masked=True)

    return kernel


def pallas_loss(y, y_pred):
    assert y.shape == y_pred.shape and y.ndim == 2
    B, D = y.shape
    itemsize = jnp.dtype(y.dtype).itemsize

    # ---- lane (feature) tiling -------------------------------------------
    tile_d = D if D <= _MAX_TILE_D else _MAX_TILE_D    # full-D or multiple of 128
    t_d = pl.cdiv(D, tile_d)
    need_col_mask = (D % tile_d) != 0

    # ---- sublane (batch) tiling: byte budget, dtype aware ------------------
    group8 = B >= 8
    if group8:
        rows_budget = max(8, ((_BLOCK_BYTES // (tile_d * itemsize)) // 8) * 8)
        tile_b = min((B // 8) * 8, rows_budget)
        chunk_rows = max(8, min(tile_b, ((_CHUNK_BYTES // (tile_d * 4)) // 8) * 8))
        tile_b = (tile_b // chunk_rows) * chunk_rows   # tile_b % chunk_rows == 0
        acc_rows = 8
    else:
        tile_b = chunk_rows = B
        acc_rows = 1

    t_b = pl.cdiv(B, tile_b)

    # ---- split row-blocks across TensorCores -------------------------------
    p_dim = max(1, min(_tensorcores_per_chip(), t_b))
    t_bp = pl.cdiv(t_b, p_dim)
    need_row_mask = (p_dim * t_bp * tile_b) != B

    kernel = _make_sse_kernel(
        B=B, D=D, tile_b=tile_b, tile_d=tile_d, chunk_rows=chunk_rows,
        t_bp=t_bp, group8=group8,
        need_row_mask=need_row_mask, need_col_mask=need_col_mask)

    def in_index_map(p, j, i):
        # Clamp so "phantom" row-blocks (when t_b % p_dim != 0) re-read the
        # last real block; their contribution is fully masked to zero.
        return (jnp.minimum(p * t_bp + i, t_b - 1), j)

    in_spec = pl.BlockSpec((tile_b, tile_d), in_index_map)
    out_spec = pl.BlockSpec((None, None, acc_rows, tile_d),
                            lambda p, j, i: (p, j, 0, 0))

    # Explicit VMEM budget: 2 inputs x 2 pipeline buffers x block
    # + double-buffered accumulator + f32 compute temporaries + headroom.
    in_block_bytes = tile_b * tile_d * itemsize
    acc_bytes = acc_rows * tile_d * 4
    tmp_bytes = 4 * chunk_rows * tile_d * 4
    vmem_limit = 4 * in_block_bytes + 2 * acc_bytes + tmp_bytes + (8 << 20)
    vmem_limit = int(min(max(vmem_limit, 32 << 20), 50 << 20))

    partials = pl.pallas_call(
        kernel,
        out_shape=jax.ShapeDtypeStruct((p_dim, t_d, acc_rows, tile_d), jnp.float32),
        grid_spec=pltpu.PrefetchScalarGridSpec(
            num_scalar_prefetch=0,
            grid=(p_dim, t_d, t_bp),
            in_specs=[in_spec, in_spec],
            out_specs=out_spec,
        ),
        compiler_params=pltpu.CompilerParams(
            # TODO(synk): on v7x verify plain "parallel" actually shards the
            # leading axis across both TensorCores; if not, switch it to
            # pltpu.CORE_PARALLEL (leading axis size == num cores).
            dimension_semantics=("parallel", "parallel", "arbitrary"),
            vmem_limit_bytes=vmem_limit,
        ),
    )(y, y_pred)

    # Single cheap cross-lane reduce + mean over batch, once, in the wrapper.
    out_dtype = jnp.result_type(y.dtype, y_pred.dtype)
    return (jnp.sum(partials) / jnp.float32(B)).astype(out_dtype)


if __name__ == "__main__":
    key = jax.random.PRNGKey(0)
    ks = jax.random.split(key, 6)

    def ref_loss(a, b):
        return jnp.mean(jnp.sum((a - b) ** 2, axis=1))

    # 1) Tile-aligned shape: pure fast path, no masking emitted at all.
    y1 = jax.random.normal(ks[0], (16, 128), dtype=jnp.float32)
    p1 = jax.random.normal(ks[1], (16, 128), dtype=jnp.float32)
    o1 = jax.block_until_ready(pallas_loss(y1, p1))
    r1 = ref_loss(y1, p1)
    assert jnp.allclose(o1, r1, rtol=1e-5, atol=1e-5), (o1, r1)

    # 2) Tiny batch (< 8 rows), odd feature dim: non-grouped accumulator path.
    y2 = jax.random.normal(ks[2], (5, 37), dtype=jnp.float32)
    p2 = jax.random.normal(ks[3], (5, 37), dtype=jnp.float32)
    o2 = jax.block_until_ready(pallas_loss(y2, p2))
    r2 = ref_loss(y2, p2)
    assert jnp.allclose(o2, r2, rtol=1e-5, atol=1e-5), (o2, r2)

    # 3) Ragged batch AND feature tails: exercises in-kernel row + col masking.
    y3 = jax.random.normal(ks[4], (20, 2500), dtype=jnp.float32)
    p3 = jax.random.normal(ks[5], (20, 2500), dtype=jnp.float32)
    o3 = jax.block_until_ready(pallas_loss(y3, p3))
    r3 = ref_loss(y3, p3)
    assert jnp.allclose(o3, r3, rtol=1e-5, atol=1e-4), (o3, r3)

    print("KERNEL_OK")
</pallas_src>

<mosaic_0001>
module attributes {stable_mosaic.version = 11 : i64} {
  func.func @kernel(%arg0: i32, %arg1: i32, %arg2: i32, %arg3: memref<16x128xf32, #tpu.memory_space<vmem>>, %arg4: memref<16x128xf32, #tpu.memory_space<vmem>>, %arg5: memref<1x1x8x128xf32, #tpu.memory_space<vmem>>) attributes {dimension_semantics = [#tpu.dimension_semantics<parallel>, #tpu.dimension_semantics<parallel>, #tpu.dimension_semantics<arbitrary>], iteration_bounds = array<i64: 1, 1, 1>, scalar_prefetch = 0 : i64, scratch_operands = 0 : i64, tpu.core_type = #tpu.core_type<tc>, window_params = [{transform_indices = @transform_0, window_bounds = array<i64: 16, 128>}, {transform_indices = @transform_1, window_bounds = array<i64: 16, 128>}, {transform_indices = @transform_2, window_bounds = array<i64: 1, 1, 8, 128>}]} {
    %c0_i32 = arith.constant 0 : i32
    %0 = arith.cmpi eq, %arg2, %c0_i32 : i32
    %1 = arith.extui %0 : i1 to i32
    %c0_i32_0 = arith.constant 0 : i32
    %2 = arith.cmpi ne, %1, %c0_i32_0 : i32
    scf.if %2 {
      %cst_12 = arith.constant 0.000000e+00 : f32
      %15 = vector.broadcast %cst_12 : f32 to vector<8x128xf32>
      %c0_13 = arith.constant 0 : index
      %c0_14 = arith.constant 0 : index
      %c0_15 = arith.constant 0 : index
      %c0_16 = arith.constant 0 : index
      %16 = vector.load %arg5[%c0_13, %c0_14, %c0_15, %c0_16] : memref<1x1x8x128xf32, #tpu.memory_space<vmem>>, vector<1x1x8x128xf32>
      %17 = vector.shape_cast %16 : vector<1x1x8x128xf32> to vector<8x128xf32>
      %18 = vector.shape_cast %15 : vector<8x128xf32> to vector<1x1x8x128xf32>
      tpu.vector_store %arg5[%c0_13, %c0_14, %c0_15, %c0_16], %18 {strides = array<i32>} : memref<1x1x8x128xf32, #tpu.memory_space<vmem>>, vector<1x1x8x128xf32>,
    } else {
    }
    %c0 = arith.constant 0 : index
    %c0_1 = arith.constant 0 : index
    %3 = vector.load %arg3[%c0, %c0_1] : memref<16x128xf32, #tpu.memory_space<vmem>>, vector<16x128xf32>
    %c0_2 = arith.constant 0 : index
    %c0_3 = arith.constant 0 : index
    %4 = vector.load %arg4[%c0_2, %c0_3] : memref<16x128xf32, #tpu.memory_space<vmem>>, vector<16x128xf32>
    %5 = arith.subf %3, %4 : vector<16x128xf32>
    %6 = arith.mulf %5, %5 : vector<16x128xf32>
    %c0_4 = arith.constant 0 : index
    %c0_5 = arith.constant 0 : index
    %c0_6 = arith.constant 0 : index
    %c0_7 = arith.constant 0 : index
    %7 = vector.load %arg5[%c0_4, %c0_5, %c0_6, %c0_7] : memref<1x1x8x128xf32, #tpu.memory_space<vmem>>, vector<1x1x8x128xf32>
    %8 = vector.shape_cast %7 : vector<1x1x8x128xf32> to vector<8x128xf32>
    %9 = vector.shape_cast %6 : vector<16x128xf32> to vector<2x8x128xf32>
    %cst = arith.constant dense<0.000000e+00> : vector<8x128xf32>
    %10 = vector.multi_reduction <add>, %9, %cst [0] : vector<2x8x128xf32> to vector<8x128xf32>
    %11 = arith.addf %8, %10 : vector<8x128xf32>
    %c0_8 = arith.constant 0 : index
    %c0_9 = arith.constant 0 : index
    %c0_10 = arith.constant 0 : index
    %c0_11 = arith.constant 0 : index
    %12 = vector.load %arg5[%c0_8, %c0_9, %c0_10, %c0_11] : memref<1x1x8x128xf32, #tpu.memory_space<vmem>>, vector<1x1x8x128xf32>
    %13 = vector.shape_cast %12 : vector<1x1x8x128xf32> to vector<8x128xf32>
    %14 = vector.shape_cast %11 : vector<8x128xf32> to vector<1x1x8x128xf32>
    tpu.vector_store %arg5[%c0_8, %c0_9, %c0_10, %c0_11], %14 {strides = array<i32>} : memref<1x1x8x128xf32, #tpu.memory_space<vmem>>, vector<1x1x8x128xf32>,
    return
  }
  func.func @transform_0(%arg0: i32, %arg1: i32, %arg2: i32) -> (i32, i32) {
    %c1_i32 = arith.constant 1 : i32
    %0 = arith.muli %arg0, %c1_i32 : i32
    %1 = arith.addi %0, %arg2 : i32
    %c0_i32 = arith.constant 0 : i32
    %2 = arith.minsi %1, %c0_i32 : i32
    %c0_i32_0 = arith.constant 0 : i32
    return %2, %arg1 : i32, i32
  }
  func.func @transform_1(%arg0: i32, %arg1: i32, %arg2: i32) -> (i32, i32) {
    %c1_i32 = arith.constant 1 : i32
    %0 = arith.muli %arg0, %c1_i32 : i32
    %1 = arith.addi %0, %arg2 : i32
    %c0_i32 = arith.constant 0 : i32
    %2 = arith.minsi %1, %c0_i32 : i32
    %c0_i32_0 = arith.constant 0 : i32
    return %2, %arg1 : i32, i32
  }
  func.func @transform_2(%arg0: i32, %arg1: i32, %arg2: i32) -> (i32, i32, i32, i32) {
    %c0_i32 = arith.constant 0 : i32
    %c0_i32_0 = arith.constant 0 : i32
    %c0_i32_1 = arith.constant 0 : i32
    return %arg0, %arg1, %c0_i32, %c0_i32_0 : i32, i32, i32, i32
  }
}

</mosaic_0001>

<llo_original>
// kernel: tpu_custom_call.1
$region0: #{tpu_custom_call.1}
  #allocation0 [shape = 'u32[]', space=smem, size = 0x4, offset = 0x4, fixed_abs, tag = 'smem constant byte address 0x4 - core index']
  #allocation1 [shape = 'u32[144,128]{1,0:T(1,128)}', space=vmem, size = 0x12000, scoped, tag = 'internal scratch']
  %s0 = inlined_call_operand.hbm [shape: f32[16,128], index: 0, kind: input, shape index: {}]
  %s1 = inlined_call_operand.hbm [shape: f32[16,128], index: 1, kind: input, shape index: {}]
  %s2 = inlined_call_operand.hbm [shape: f32[1,1,8,128], index: 2, kind: output, shape index: {}]
  %s3 = sld [smem:[#allocation0]]
  $region30: #{tpu_custom_call.1} parent=0
    _
  %s5 = ssub.s32 1, %s3
  %s6 = scalar_select 0, %s5, %s3
  $region1: #{tpu_custom_call.1} parent=0
    #allocation2 [shape = 'u8[8192]{0}', space=vmem, size = 0x2000, scoped, tag = 'input window, operand 0, single buffered']
    #allocation3 [shape = 's32[1]{0}', space=sflag, size = 0x4, scoped, tag = 'scoped memory for tpu_custom_call.1']
    #allocation4 [shape = 's32[1]{0}', space=sflag, size = 0x4, scoped, tag = 'scoped memory for tpu_custom_call.1']
    #allocation5 [shape = 'u8[8192]{0}', space=vmem, size = 0x2000, scoped, tag = 'input window, operand 1, single buffered']
    #allocation6 [shape = 's32[1]{0}', space=sflag, size = 0x4, scoped, tag = 'scoped memory for tpu_custom_call.1']
    #allocation7 [shape = 'u8[4096]{0}', space=vmem, size = 0x1000, scoped, tag = 'output window, operand 0, single buffered']
    %7 = vsyncpa [#allocation3], 0
    %8 = vsyncpa [#allocation6], 0
    %9 = vsyncpa [#allocation4], 0
    // Predicated region
    $region2: #{tpu_custom_call.1} parent=1 // pred_check
      _
    $region3: #{tpu_custom_call.1} parent=1 // pred_check_branch
      %11 = sbr.rel (0) target = $region5
    $region4: #{tpu_custom_call.1} parent=1 // pred_region
      %s12 = sadd.s32 0, 0
      %p13 = scmp.lt.s32.totalorder %s12, 0
      %s14 = scalar_select %p13, %s12, 0
      %s15 = smul.u32 2, %s14
      %s17 = ssub.s32 256, 256
      %18 = vsyncadd [#allocation3], %s17
      %s19 = smul.addr %s15, 128
      %s20 = scalar_lea.hbm %s0, %s19
      %s21 = sshll.u32 [#allocation2], 4
      %s22 = int_to_ptr.vmem [resolvable:$true] %s21
      %27 = dma.hbm_to_vmem [thread:$0]  %s20, 256, %s22, [#allocation3], 128, 128, 8
    $region5: #{tpu_custom_call.1} parent=1 // pred_fallthru
      _
    // Predicated region
    $region6: #{tpu_custom_call.1} parent=1 // pred_check
      _
    $region7: #{tpu_custom_call.1} parent=1 // pred_check_branch
      %29 = sbr.rel (0) target = $region9
    $region8: #{tpu_custom_call.1} parent=1 // pred_region
      %s30 = sadd.s32 0, 0
      %p31 = scmp.lt.s32.totalorder %s30, 0
      %s32 = scalar_select %p31, %s30, 0
      %s33 = smul.u32 2, %s32
      %s35 = ssub.s32 256, 256
      %36 = vsyncadd [#allocation6], %s35
      %s37 = smul.addr %s33, 128
      %s38 = scalar_lea.hbm %s1, %s37
      %s39 = sshll.u32 [#allocation5], 4
      %s40 = int_to_ptr.vmem [resolvable:$true] %s39
      %45 = dma.hbm_to_vmem [thread:$0]  %s38, 256, %s40, [#allocation6], 128, 128, 8
    $region9: #{tpu_custom_call.1} parent=1 // pred_fallthru
      _
    // Predicated region
    $region10: #{tpu_custom_call.1} parent=1 // pred_check
      _
    $region11: #{tpu_custom_call.1} parent=1 // pred_check_branch
      %47 = sbr.rel (0) target = $region13
    $region12: #{tpu_custom_call.1} parent=1 // pred_region
      %48 = dma.done [#allocation3], 256
    $region13: #{tpu_custom_call.1} parent=1 // pred_fallthru
      _
    // Predicated region
    $region14: #{tpu_custom_call.1} parent=1 // pred_check
      _
    $region15: #{tpu_custom_call.1} parent=1 // pred_check_branch
      %50 = sbr.rel (0) target = $region17
    $region16: #{tpu_custom_call.1} parent=1 // pred_region
      %51 = dma.done [#allocation6], 256
    $region17: #{tpu_custom_call.1} parent=1 // pred_fallthru
      _
    %s52 = sadd.s32 0, 0
    %p53 = scmp.lt.s32.totalorder %s52, 0
    %s54 = scalar_select %p53, %s52, 0
    %s55 = smul.u32 2, %s54
    %s56 = sadd.s32 0, 0
    %p57 = scmp.lt.s32.totalorder %s56, 0
    %s58 = scalar_select %p57, %s56, 0
    %s59 = smul.u32 2, %s58
    %p60 = scmp.eq.s32.totalorder 0, 0
    // Predicated region
    $region18: #{tpu_custom_call.1} parent=1 // pred_check
      %p61 = pneg %p60
    $region19: #{tpu_custom_call.1} parent=1 // pred_check_branch
      %63 = sbr.rel (%p61) target = $region21
    $region20: #{tpu_custom_call.1} parent=1 // pred_region
      %64 = vst [vmem:[#allocation7] sm:$0xff] 0.0
    $region21: #{tpu_custom_call.1} parent=1 // pred_fallthru
      _
    %v65 = vld [vmem:[#allocation2] sm:$0xff]
    %v66 = vld [vmem:[#allocation2 + $0x8] sm:$0xff]
    %v67 = vld [vmem:[#allocation5] sm:$0xff]
    %v68 = vld [vmem:[#allocation5 + $0x8] sm:$0xff]
    %v69 = vsub.f32 %v65, %v67
    %v70 = vsub.f32 %v66, %v68
    %v71 = vmul.f32 %v69, %v69
    %v72 = vmul.f32 %v70, %v70
    %v73 = vld [vmem:[#allocation7] sm:$0xff]
    %v74 = vadd.f32 %v71, %v72
    %v75 = vadd.f32 %v73, %v74
    %76 = vst [vmem:[#allocation7] sm:$0xff] %v75
    // Predicated region
    $region22: #{tpu_custom_call.1} parent=1 // pred_check
      _
    $region23: #{tpu_custom_call.1} parent=1 // pred_check_branch
      %78 = sbr.rel (0) target = $region25
    $region24: #{tpu_custom_call.1} parent=1 // pred_region
      %s80 = ssub.s32 128, 128
      %81 = vsyncadd [#allocation4], %s80
      %s83 = sshll.u32 [#allocation7], 4
      %s84 = int_to_ptr.vmem [resolvable:$true] %s83
      %86 = dma.vmem_to_hbm [thread:$0]  %s84, 128, %s2, [#allocation4]
    $region25: #{tpu_custom_call.1} parent=1 // pred_fallthru
      _
    // Predicated region
    $region26: #{tpu_custom_call.1} parent=1 // pred_check
      _
    $region27: #{tpu_custom_call.1} parent=1 // pred_check_branch
      %88 = sbr.rel (0) target = $region29
    $region28: #{tpu_custom_call.1} parent=1 // pred_region
      %89 = dma.done [#allocation4], 128
    $region29: #{tpu_custom_call.1} parent=1 // pred_fallthru
      _
    %90 = vsyncpa [#allocation3], 1
    %91 = vsyncpa [#allocation6], 1
    %92 = vsyncpa [#allocation4], 1

</llo_original>
